<compile_context>
chip_gen: v6e
topology: v6e:2x2x1
jax: 0.10.0
libtpu: 0.0.40
codegen_flags: <defaults>
</compile_context>

<pallas_src>
import functools

import numpy as np
import jax
import jax.numpy as jnp
from jax.experimental import pallas as pl
from jax.experimental.pallas import tpu as pltpu


def _round_up(x, m):
    return ((x + m - 1) // m) * m


def _choose_tiling(size, requested):
    """Return (padded, tile): tile is a multiple of 128, <= max(requested, 128),
    divides `padded`, and `padded` wastes at most ~6% over round_up(size, 128)."""
    base_pad = _round_up(size, 128)
    slack = base_pad // 16
    best_pad, best_tile = base_pad, 128
    t = 128
    while t <= max(requested, 128):
        padded = _round_up(size, t)
        if padded <= base_pad + slack and t >= best_tile:
            best_pad, best_tile = padded, t
        t += 128
    return best_pad, best_tile


# ---------------------------------------------------------------------------
# One-time precompute (equivalent to _ele2coe / _fix_inputs / _base in aTEAM).
# Runs only in update_inputs, exactly like the PyTorch module's buffer setup.
# ---------------------------------------------------------------------------
def _ele2coe(m, d):
    """Multi-indices of the (d+1)**m local Lagrange nodes, shape [K, m]."""
    grids = np.stack(np.meshgrid(*([np.arange(d + 1)] * m), indexing="ij"),
                     axis=-1)
    return grids.reshape(-1, m).astype(np.int32)


def _fix_inputs(points, m, d, mesh_bound, mesh_size, ele2coe):
    """points: [N, m]. Returns flat_indices [N, K] int32 and points_shift [N, m]."""
    mesh_bound = np.asarray(mesh_bound, dtype=np.float64).reshape(2, m)
    mesh_size = np.asarray(mesh_size, dtype=np.int64).reshape(m)
    mesh_delta = (mesh_bound[1] - mesh_bound[0]) / mesh_size

    t = (points - jnp.asarray(mesh_bound[0], points.dtype)[None, :]) \
        / jnp.asarray(mesh_delta, points.dtype)[None, :]
    elem = jnp.floor(t)
    elem = jnp.clip(elem, 0.0, jnp.asarray(mesh_size - 1, points.dtype))
    points_shift = t - elem                      # local coords (extrapolates
    elem = elem.astype(jnp.int32)                # outside the mesh, like ref)

    coe_shape = mesh_size * d + 1                # per-dim size of interp_coe
    strides = np.ones(m, dtype=np.int64)
    for i in range(m - 2, -1, -1):
        strides[i] = strides[i + 1] * coe_shape[i + 1]

    g = elem[:, None, :] * d + jnp.asarray(ele2coe, jnp.int32)[None, :, :]  # [N,K,m]
    flat = jnp.sum(g * jnp.asarray(strides, jnp.int32)[None, None, :], axis=-1)
    return flat.astype(jnp.int32), points_shift


def _base(points_shift, m, d, ele2coe):
    """Tensor-product Lagrange basis weights per point / local node, [N, K]."""
    s = points_shift * d                          # [N, m], in [0, d]
    nodes = np.arange(d + 1, dtype=np.float64)
    cols = []
    for j in range(d + 1):
        num = jnp.ones_like(s)
        den = 1.0
        for k in range(d + 1):
            if k == j:
                continue
            num = num * (s - float(nodes[k]))
            den = den * (j - float(nodes[k]))
        cols.append(num / den)
    L = jnp.stack(cols, axis=-1)                  # [N, m, d+1]
    dim_idx = np.arange(m)[None, :]               # (1, m)
    return jnp.prod(L[:, dim_idx, ele2coe], axis=-1)   # [N, K]


def _build_wt(flat_indices, base, c_pad, n_pad):
    """Dense weighted one-hot W^T[c, n] = sum_k base[n,k]*[flat_indices[n,k]==c],
    f32 [c_pad, n_pad]; padding rows/columns are zeros."""
    N, K = flat_indices.shape
    rows = jnp.broadcast_to(jnp.arange(N, dtype=jnp.int32)[:, None],
                            (N, K)).reshape(-1)
    return jnp.zeros((c_pad, n_pad), jnp.float32).at[
        flat_indices.reshape(-1), rows].add(base.reshape(-1).astype(jnp.float32))


# ---------------------------------------------------------------------------
# Pallas kernel: lane-dense MXU matvec, reduction over the coefficient axis.
#   out[0:1, n_tile] += coe[0:1, c_tile] @ W^T[c_tile, n_tile]
# ---------------------------------------------------------------------------
def _interp_matvec_kernel(coe_ref, wt_ref, out_ref, *, precision):
    @pl.when(pl.program_id(1) == 0)
    def _init():
        out_ref[...] = jnp.zeros_like(out_ref)
    out_ref[...] += jnp.dot(coe_ref[...], wt_ref[...],
                            precision=precision,
                            preferred_element_type=jnp.float32)


@functools.partial(
    jax.jit,
    static_argnames=("n_valid", "out_shape", "tile_n", "tile_c", "precision",
                     "vmem_limit_bytes"))
def lagrange_interp_fix_inputs_forward(interp_coe, wt_pad, *, n_valid, out_shape,
                                       tile_n, tile_c, precision=None,
                                       vmem_limit_bytes=None):
    c_pad, n_pad = wt_pad.shape
    coe_flat = interp_coe.reshape(-1)
    c = coe_flat.shape[0]
    # Per-forward packing of the trainable parameter: a single (1, c_pad) row
    # in the W^T dtype (tiny O(C) op; no 8-row slab, no extra fill traffic).
    coe_row = jnp.zeros((1, c_pad), wt_pad.dtype).at[0, :c].set(
        coe_flat.astype(wt_pad.dtype))

    out = pl.pallas_call(
        functools.partial(_interp_matvec_kernel, precision=precision),
        out_shape=jax.ShapeDtypeStruct((1, n_pad), jnp.float32),
        grid_spec=pltpu.PrefetchScalarGridSpec(
            num_scalar_prefetch=0,
            grid=(n_pad // tile_n, c_pad // tile_c),       # reduction axis last
            in_specs=[
                pl.BlockSpec((1, tile_c), lambda i, j: (0, j)),        # coe row
                pl.BlockSpec((tile_c, tile_n), lambda i, j: (j, i)),   # W^T tile
            ],
            out_specs=pl.BlockSpec((1, tile_n), lambda i, j: (0, i)),  # lane-dense
        ),
        compiler_params=pltpu.CompilerParams(
            dimension_semantics=("parallel", "arbitrary"),
            vmem_limit_bytes=vmem_limit_bytes),
    )(coe_row, wt_pad)
    return out[0, :n_valid].reshape(out_shape)


# ---------------------------------------------------------------------------
# Module equivalent of LagrangeInterpFixInputs
# ---------------------------------------------------------------------------
class LagrangeInterpFixInputs:
    def __init__(self, inputs, interp_dim, interp_degree, mesh_bound, mesh_size,
                 key, tile_n=512, tile_c=2048, wt_dtype=jnp.bfloat16,
                 matmul_precision=None, vmem_limit_bytes=None):
        self.m = int(interp_dim)
        self.d = int(interp_degree)
        self.mesh_bound = np.asarray(mesh_bound, np.float64).reshape(2, self.m)
        self.mesh_size = np.asarray(mesh_size, np.int64).reshape(self.m)
        self.ele2coe = _ele2coe(self.m, self.d)
        coe_shape = tuple(int(s) for s in (self.mesh_size * self.d + 1))
        # deterministic stand-in for torch.Tensor(*shape).normal_()
        self.interp_coe = jax.random.normal(key, coe_shape, dtype=jnp.float32)
        self._tile_n_req = int(tile_n)
        self._tile_c_req = int(tile_c)
        self._wt_dtype = wt_dtype
        self._matmul_precision = matmul_precision
        self._vmem_limit_bytes = vmem_limit_bytes
        self.update_inputs(inputs)

    def update_inputs(self, inputs):
        inputs = jnp.asarray(inputs, jnp.float32)
        if self.m == 1 and inputs.shape[-1] != 1:
            inputs = inputs[..., None]
        self.inputs_size = inputs.shape
        self._inputs = inputs
        pts = inputs.reshape(-1, self.m)
        self.flat_indices, self.points_shift = _fix_inputs(
            pts, self.m, self.d, self.mesh_bound, self.mesh_size, self.ele2coe)
        self.base = _base(self.points_shift, self.m, self.d, self.ele2coe)

        # ---- one-time heavy precompute: weighted one-hot W^T [c_pad, n_pad] ----
        N = int(pts.shape[0])
        C = int(np.prod(np.asarray(self.interp_coe.shape)))

        # Tight padding (128 fringe, <= ~6% slack) with dividing tile sizes.
        base_n_pad = _round_up(N, 128)
        req_n = min(self._tile_n_req, base_n_pad)
        if base_n_pad >= 1024:
            # Ensure >= 2 grid steps on the "parallel" n axis (v7x: 2 cores),
            # while keeping DMA rows >= 512 lanes.
            req_n = min(req_n, max(512, base_n_pad // 2))
        n_pad, tile_n = _choose_tiling(N, req_n)
        c_pad, tile_c = _choose_tiling(C, min(self._tile_c_req,
                                              _round_up(C, 128)))

        wt = _build_wt(self.flat_indices, self.base, c_pad, n_pad)
        # bf16 table halves the dominant HBM stream (bandwidth-bound forward);
        # ~3 significant digits on basis weights. Use wt_dtype=float32 for full
        # precision (optionally with matmul_precision=Precision.HIGHEST).
        self._wt_pad = wt.astype(self._wt_dtype)
        self._n_valid = N
        self._tile_n = tile_n
        self._tile_c = tile_c

    def forward(self):
        return lagrange_interp_fix_inputs_forward(
            self.interp_coe, self._wt_pad,
            n_valid=self._n_valid,
            out_shape=tuple(int(s) for s in self.inputs_size[:-1]),
            tile_n=self._tile_n, tile_c=self._tile_c,
            precision=self._matmul_precision,
            vmem_limit_bytes=self._vmem_limit_bytes)


def _reference_forward(interp_coe, flat_indices, base, out_shape):
    coe_resp = jnp.take(interp_coe.reshape(-1),
                        flat_indices.reshape(-1)).reshape(flat_indices.shape)
    return jnp.sum(coe_resp * base, axis=1).reshape(out_shape)


if __name__ == "__main__":
    key = jax.random.PRNGKey(0)
    k_coe, k_pts = jax.random.split(key)

    m, d = 2, 2
    mesh_bound = ((0.0, 0.0), (1.0, 1.0))
    mesh_size = (8, 8)

    # fixed inputs: a [2, 16, 16, 2] batch of query points inside the mesh domain
    pts = jax.random.uniform(k_pts, (2, 16, 16, m), dtype=jnp.float32,
                             minval=0.0, maxval=0.999)

    module = LagrangeInterpFixInputs(pts, m, d, mesh_bound, mesh_size, k_coe)
    out = jax.block_until_ready(module.forward())
    assert out.shape == pts.shape[:-1]

    # Semantic reference: gather formulation (what the PyTorch module computes).
    ref = _reference_forward(module.interp_coe, module.flat_indices,
                             module.base, tuple(module.inputs_size[:-1]))
    ref64 = np.asarray(ref, np.float64)

    # (1) Tight (1e-5) float64 check of the fixed-table -> W^T precompute,
    #     independent of MXU / bf16 precision: catches indexing/scatter bugs
    #     that a loose kernel tolerance could otherwise mask.
    c_pad, n_pad = module._wt_pad.shape
    wt64 = np.asarray(_build_wt(module.flat_indices, module.base, c_pad, n_pad),
                      np.float64)
    coe64 = np.zeros(c_pad, np.float64)
    coe64[:module.interp_coe.size] = np.asarray(module.interp_coe,
                                                np.float64).reshape(-1)
    dense64 = (coe64 @ wt64)[:module._n_valid].reshape(ref64.shape)
    np.testing.assert_allclose(dense64, ref64, rtol=1e-5, atol=1e-5)

    # (2) Pallas kernel, default bf16 W^T stream (bandwidth-optimal path).
    #     Tolerance is set by the bf16 cast of the basis-weight table.
    np.testing.assert_allclose(np.asarray(out, np.float64), ref64,
                               rtol=3e-2, atol=3e-2)

    # (3) Pallas kernel with an f32 W^T stream (accuracy-first option).
    module_f32 = LagrangeInterpFixInputs(pts, m, d, mesh_bound, mesh_size,
                                         k_coe, wt_dtype=jnp.float32)
    out_f32 = jax.block_until_ready(module_f32.forward())
    np.testing.assert_allclose(np.asarray(out_f32, np.float64), ref64,
                               rtol=2e-2, atol=2e-2)
    # TODO(synk): for ~1e-6-tight f32 results pass wt_dtype=jnp.float32 together
    # with matmul_precision=jax.lax.Precision.HIGHEST (extra MXU passes are
    # fully hidden under the HBM stream of this bandwidth-bound kernel).

    print("KERNEL_OK")
</pallas_src>

<mosaic_0001>
module attributes {stable_mosaic.version = 11 : i64} {
  func.func @_interp_matvec_kernel(%arg0: i32, %arg1: i32, %arg2: memref<1x384xbf16, #tpu.memory_space<vmem>>, %arg3: memref<384x512xbf16, #tpu.memory_space<vmem>>, %arg4: memref<1x512xf32, #tpu.memory_space<vmem>>) attributes {dimension_semantics = [#tpu.dimension_semantics<parallel>, #tpu.dimension_semantics<arbitrary>], iteration_bounds = array<i64: 1, 1>, scalar_prefetch = 0 : i64, scratch_operands = 0 : i64, tpu.core_type = #tpu.core_type<tc>, window_params = [{transform_indices = @transform_0, window_bounds = array<i64: 1, 384>}, {transform_indices = @transform_1, window_bounds = array<i64: 384, 512>}, {transform_indices = @transform_2, window_bounds = array<i64: 1, 512>}]} {
    %c0_i32 = arith.constant 0 : i32
    %0 = arith.cmpi eq, %arg1, %c0_i32 : i32
    %1 = arith.extui %0 : i1 to i32
    %c0_i32_0 = arith.constant 0 : i32
    %2 = arith.cmpi ne, %1, %c0_i32_0 : i32
    scf.if %2 {
      %cst_8 = arith.constant 0.000000e+00 : f32
      %9 = vector.broadcast %cst_8 : f32 to vector<1x512xf32>
      %c0_9 = arith.constant 0 : index
      %c0_10 = arith.constant 0 : index
      %10 = vector.load %arg4[%c0_9, %c0_10] : memref<1x512xf32, #tpu.memory_space<vmem>>, vector<1x512xf32>
      tpu.vector_store %arg4[%c0_9, %c0_10], %9 {strides = array<i32>} : memref<1x512xf32, #tpu.memory_space<vmem>>, vector<1x512xf32>,
    } else {
    }
    %c0 = arith.constant 0 : index
    %c0_1 = arith.constant 0 : index
    %3 = vector.load %arg4[%c0, %c0_1] : memref<1x512xf32, #tpu.memory_space<vmem>>, vector<1x512xf32>
    %c0_2 = arith.constant 0 : index
    %c0_3 = arith.constant 0 : index
    %4 = vector.load %arg2[%c0_2, %c0_3] : memref<1x384xbf16, #tpu.memory_space<vmem>>, vector<1x384xbf16>
    %c0_4 = arith.constant 0 : index
    %c0_5 = arith.constant 0 : index
    %5 = vector.load %arg3[%c0_4, %c0_5] : memref<384x512xbf16, #tpu.memory_space<vmem>>, vector<384x512xbf16>
    %cst = arith.constant dense<0.000000e+00> : vector<1x512xf32>
    %6 = tpu.matmul %4, %5, %cst {dimension_numbers = #tpu.dot_dimension_numbers<[1], [0], [0], [1], [0, 0, 1, 1], [], []>} : vector<1x384xbf16>, vector<384x512xbf16>, vector<1x512xf32> -> vector<1x512xf32>
    %7 = arith.addf %3, %6 : vector<1x512xf32>
    %c0_6 = arith.constant 0 : index
    %c0_7 = arith.constant 0 : index
    %8 = vector.load %arg4[%c0_6, %c0_7] : memref<1x512xf32, #tpu.memory_space<vmem>>, vector<1x512xf32>
    tpu.vector_store %arg4[%c0_6, %c0_7], %7 {strides = array<i32>} : memref<1x512xf32, #tpu.memory_space<vmem>>, vector<1x512xf32>,
    return
  }
  func.func @transform_0(%arg0: i32, %arg1: i32) -> (i32, i32) {
    %c0_i32 = arith.constant 0 : i32
    %c0_i32_0 = arith.constant 0 : i32
    return %c0_i32, %arg1 : i32, i32
  }
  func.func @transform_1(%arg0: i32, %arg1: i32) -> (i32, i32) {
    %c0_i32 = arith.constant 0 : i32
    return %arg1, %arg0 : i32, i32
  }
  func.func @transform_2(%arg0: i32, %arg1: i32) -> (i32, i32) {
    %c0_i32 = arith.constant 0 : i32
    %c0_i32_0 = arith.constant 0 : i32
    return %c0_i32, %arg0 : i32, i32
  }
}

</mosaic_0001>

<llo_original>
// kernel: squeeze.1
$region0: #{squeeze.1}
  %s0 = inlined_call_operand.vmem [shape: f32[512], index: 0, kind: input, shape index: {}]
  %s1 = inlined_call_operand.hbm [shape: f32[2,16,16], index: 1, kind: output, shape index: {}]
  $region1: #{squeeze.1} parent=0
    #allocation0 [shape = 'u8[16384]{0}', space=vmem, size = 0x4000, scoped, tag = 'operand span for operand 1']
    #allocation1 [shape = 's32[1]{0}', space=sflag, size = 0x4, scoped, tag = 'scoped memory for squeeze.1']
    #allocation2 [shape = 'u8[4096]{0}', space=vmem, size = 0x1000, scoped, tag = 'scoped mem for input reshape']
    %2 = vsyncpa [#allocation1], 0
    %s4 = sshll.u32 1, 4
    %s5 = ssub.s32 %s4, 1
    %v6 = vld [vmem:[%s0] sm:%s5]
    %7 = vst [vmem:[#allocation2] sm:%s5] %v6
    %v8 = vld [vmem:[#allocation2] sm:$0xf]
    %vm9 = vcmask 130048
    %10 = vst.msk [vmem:[#allocation0] ss:$8 sm:$0xf] %vm9, %v8
    %v11 = vld [vmem:[#allocation2] sm:$0xf]
    %12 = vrot.lane.b32.xlu0 %v11, 112
    %v13 = vpop.permute.xlu0 %12
    %vm14 = vcmask 130048
    %s15 = scalar_lea.vmem [#allocation0], 1
    %16 = vst.msk [vmem:[%s15] ss:$8 sm:$0xf] %vm14, %v13
    %v17 = vld [vmem:[#allocation2] sm:$0xf]
    %18 = vrot.lane.b32.xlu0 %v17, 96
    %v19 = vpop.permute.xlu0 %18
    %vm20 = vcmask 130048
    %s21 = scalar_lea.vmem [#allocation0], 2
    %22 = vst.msk [vmem:[%s21] ss:$8 sm:$0xf] %vm20, %v19
    %v23 = vld [vmem:[#allocation2] sm:$0xf]
    %24 = vrot.lane.b32.xlu0 %v23, 80
    %v25 = vpop.permute.xlu0 %24
    %vm26 = vcmask 130048
    %s27 = scalar_lea.vmem [#allocation0], 3
    %28 = vst.msk [vmem:[%s27] ss:$8 sm:$0xf] %vm26, %v25
    %v29 = vld [vmem:[#allocation2] sm:$0xf]
    %30 = vrot.lane.b32.xlu0 %v29, 64
    %v31 = vpop.permute.xlu0 %30
    %vm32 = vcmask 130048
    %s33 = scalar_lea.vmem [#allocation0], 4
    %34 = vst.msk [vmem:[%s33] ss:$8 sm:$0xf] %vm32, %v31
    %v35 = vld [vmem:[#allocation2] sm:$0xf]
    %36 = vrot.lane.b32.xlu0 %v35, 48
    %v37 = vpop.permute.xlu0 %36
    %vm38 = vcmask 130048
    %s39 = scalar_lea.vmem [#allocation0], 5
    %40 = vst.msk [vmem:[%s39] ss:$8 sm:$0xf] %vm38, %v37
    %v41 = vld [vmem:[#allocation2] sm:$0xf]
    %42 = vrot.lane.b32.xlu0 %v41, 32
    %v43 = vpop.permute.xlu0 %42
    %vm44 = vcmask 130048
    %s45 = scalar_lea.vmem [#allocation0], 6
    %46 = vst.msk [vmem:[%s45] ss:$8 sm:$0xf] %vm44, %v43
    %v47 = vld [vmem:[#allocation2] sm:$0xf]
    %48 = vrot.lane.b32.xlu0 %v47, 16
    %v49 = vpop.permute.xlu0 %48
    %vm50 = vcmask 130048
    %s51 = scalar_lea.vmem [#allocation0], 7
    %52 = vst.msk [vmem:[%s51] ss:$8 sm:$0xf] %vm50, %v49
    %s54 = ssub.s32 512, 512
    %55 = vsyncadd [#allocation1], %s54
    %s57 = sshll.u32 [#allocation0], 4
    %s58 = int_to_ptr.vmem [resolvable:$true] %s57
    %60 = dma.vmem_to_hbm [thread:$0]  %s58, 512, %s1, [#allocation1]
    %61 = dma.done [#allocation1], 512
    %62 = vsyncpa [#allocation1], 1

// kernel: lagrange_interp_fix_inputs_forward.1
$region0: #{lagrange_interp_fix_inputs_forward.1}
  #allocation0 [shape = 'u32[]', space=smem, size = 0x4, offset = 0x4, fixed_abs, tag = 'smem constant byte address 0x4 - core index']
  #allocation1 [shape = 'u32[144,128]{1,0:T(1,128)}', space=vmem, size = 0x12000, scoped, tag = 'internal scratch']
  %s0 = inlined_call_operand.vmem [shape: bf16[1,384], index: 0, kind: input, shape index: {}]
  %s1 = inlined_call_operand.hbm [shape: bf16[384,512], index: 1, kind: input, shape index: {}]
  %s2 = inlined_call_operand.vmem [shape: f32[1,512], index: 2, kind: output, shape index: {}]
  %s3 = sld [smem:[#allocation0]]
  $region26: #{lagrange_interp_fix_inputs_forward.1} parent=0
    _
  %s5 = ssub.s32 1, %s3
  %s6 = scalar_select 0, %s5, %s3
  $region1: #{lagrange_interp_fix_inputs_forward.1} parent=0
    #allocation2 [shape = 'u8[393216]{0}', space=vmem, size = 0x60000, scoped, tag = 'input window, operand 1, single buffered']
    #allocation3 [shape = 's32[1]{0}', space=sflag, size = 0x4, scoped, tag = 'scoped memory for lagrange_interp_fix_inputs_forward.1']
    %7 = vsyncpa [#allocation3], 0
    // Predicated region
    $region2: #{lagrange_interp_fix_inputs_forward.1} parent=1 // pred_check
      _
    $region3: #{lagrange_interp_fix_inputs_forward.1} parent=1 // pred_check_branch
      %9 = sbr.rel (0) target = $region5
    $region4: #{lagrange_interp_fix_inputs_forward.1} parent=1 // pred_region
      _
    $region5: #{lagrange_interp_fix_inputs_forward.1} parent=1 // pred_fallthru
      _
    // Predicated region
    $region6: #{lagrange_interp_fix_inputs_forward.1} parent=1 // pred_check
      _
    $region7: #{lagrange_interp_fix_inputs_forward.1} parent=1 // pred_check_branch
      %11 = sbr.rel (0) target = $region9
    $region8: #{lagrange_interp_fix_inputs_forward.1} parent=1 // pred_region
      %s13 = ssub.s32 12288, 12288
      %14 = vsyncadd [#allocation3], %s13
      %s15 = sshll.u32 [#allocation2], 4
      %s16 = int_to_ptr.vmem [resolvable:$true] %s15
      %21 = dma.hbm_to_vmem [thread:$0]  %s1, 12288, %s16, [#allocation3], 256, 256, 16
    $region9: #{lagrange_interp_fix_inputs_forward.1} parent=1 // pred_fallthru
      _
    // Predicated region
    $region10: #{lagrange_interp_fix_inputs_forward.1} parent=1 // pred_check
      _
    $region11: #{lagrange_interp_fix_inputs_forward.1} parent=1 // pred_check_branch
      %23 = sbr.rel (0) target = $region13
    $region12: #{lagrange_interp_fix_inputs_forward.1} parent=1 // pred_region
      %24 = dma.done [#allocation3], 12288
    $region13: #{lagrange_interp_fix_inputs_forward.1} parent=1 // pred_fallthru
      _
    %p26 = scmp.eq.s32.totalorder 0, 0
    // Predicated region
    $region14: #{lagrange_interp_fix_inputs_forward.1} parent=1 // pred_check
      %p27 = pneg %p26
    $region15: #{lagrange_interp_fix_inputs_forward.1} parent=1 // pred_check_branch
      %29 = sbr.rel (%p27) target = $region17
    $region16: #{lagrange_interp_fix_inputs_forward.1} parent=1 // pred_region
      %v30 = vlaneseq
      %vm31 = vcmp.ge.s32.totalorder %v30, 0
      %vm32 = vcmp.lt.s32.totalorder %v30, 512
      %vm33 = vmand %vm31, %vm32
      %34 = vst.msk [vmem:[%s2] sm:$0xf] %vm33, 0.0
    $region17: #{lagrange_interp_fix_inputs_forward.1} parent=1 // pred_fallthru
      _
    %v35 = vld [vmem:[%s2] sm:$0xf]
    %v36 = vld [vmem:[%s0] sm:$0x7]
    %v37 = vld [vmem:[#allocation2] sm:$0xff]
    %v38 = vld [vmem:[#allocation2 + $0x8] sm:$0xff]
    %v39 = vld [vmem:[#allocation2 + $0x10] sm:$0xff]
    %v40 = vld [vmem:[#allocation2 + $0x18] sm:$0xff]
    %v41 = vld [vmem:[#allocation2 + $0x20] sm:$0xff]
    %v42 = vld [vmem:[#allocation2 + $0x28] sm:$0xff]
    %v43 = vld [vmem:[#allocation2 + $0x30] sm:$0xff]
    %v44 = vld [vmem:[#allocation2 + $0x38] sm:$0xff]
    %v45 = vld [vmem:[#allocation2 + $0x40] sm:$0xff]
    %v46 = vld [vmem:[#allocation2 + $0x48] sm:$0xff]
    %v47 = vld [vmem:[#allocation2 + $0x50] sm:$0xff]
    %v48 = vld [vmem:[#allocation2 + $0x58] sm:$0xff]
    %v49 = vld [vmem:[#allocation2 + $0x60] sm:$0xff]
    %v50 = vld [vmem:[#allocation2 + $0x68] sm:$0xff]
    %v51 = vld [vmem:[#allocation2 + $0x70] sm:$0xff]
    %v52 = vld [vmem:[#allocation2 + $0x78] sm:$0xff]
    %v53 = vld [vmem:[#allocation2 + $0x80] sm:$0xff]
    %v54 = vld [vmem:[#allocation2 + $0x88] sm:$0xff]
    %v55 = vld [vmem:[#allocation2 + $0x90] sm:$0xff]
    %v56 = vld [vmem:[#allocation2 + $0x98] sm:$0xff]
    %v57 = vld [vmem:[#allocation2 + $0xa0] sm:$0xff]
    %v58 = vld [vmem:[#allocation2 + $0xa8] sm:$0xff]
    %v59 = vld [vmem:[#allocation2 + $0xb0] sm:$0xff]
    %v60 = vld [vmem:[#allocation2 + $0xb8] sm:$0xff]
    %v61 = vld [vmem:[#allocation2 + $0xc0] sm:$0xff]
    %v62 = vld [vmem:[#allocation2 + $0xc8] sm:$0xff]
    %v63 = vld [vmem:[#allocation2 + $0xd0] sm:$0xff]
    %v64 = vld [vmem:[#allocation2 + $0xd8] sm:$0xff]
    %v65 = vld [vmem:[#allocation2 + $0xe0] sm:$0xff]
    %v66 = vld [vmem:[#allocation2 + $0xe8] sm:$0xff]
    %v67 = vld [vmem:[#allocation2 + $0xf0] sm:$0xff]
    %v68 = vld [vmem:[#allocation2 + $0xf8] sm:$0xff]
    %v69 = vld [vmem:[#allocation2 + $0x100] sm:$0xff]
    %v70 = vld [vmem:[#allocation2 + $0x108] sm:$0xff]
    %v71 = vld [vmem:[#allocation2 + $0x110] sm:$0xff]
    %v72 = vld [vmem:[#allocation2 + $0x118] sm:$0xff]
    %v73 = vld [vmem:[#allocation2 + $0x120] sm:$0xff]
    %v74 = vld [vmem:[#allocation2 + $0x128] sm:$0xff]
    %v75 = vld [vmem:[#allocation2 + $0x130] sm:$0xff]
    %v76 = vld [vmem:[#allocation2 + $0x138] sm:$0xff]
    %v77 = vld [vmem:[#allocation2 + $0x140] sm:$0xff]
    %v78 = vld [vmem:[#allocation2 + $0x148] sm:$0xff]
    %v79 = vld [vmem:[#allocation2 + $0x150] sm:$0xff]
    %v80 = vld [vmem:[#allocation2 + $0x158] sm:$0xff]
    %v81 = vld [vmem:[#allocation2 + $0x160] sm:$0xff]
    %v82 = vld [vmem:[#allocation2 + $0x168] sm:$0xff]
    %v83 = vld [vmem:[#allocation2 + $0x170] sm:$0xff]
    %v84 = vld [vmem:[#allocation2 + $0x178] sm:$0xff]
    %v85 = vld [vmem:[#allocation2 + $0x180] sm:$0xff]
    %v86 = vld [vmem:[#allocation2 + $0x188] sm:$0xff]
    %v87 = vld [vmem:[#allocation2 + $0x190] sm:$0xff]
    %v88 = vld [vmem:[#allocation2 + $0x198] sm:$0xff]
    %v89 = vld [vmem:[#allocation2 + $0x1a0] sm:$0xff]
    %v90 = vld [vmem:[#allocation2 + $0x1a8] sm:$0xff]
    %v91 = vld [vmem:[#allocation2 + $0x1b0] sm:$0xff]
    %v92 = vld [vmem:[#allocation2 + $0x1b8] sm:$0xff]
    %v93 = vld [vmem:[#allocation2 + $0x1c0] sm:$0xff]
    %v94 = vld [vmem:[#allocation2 + $0x1c8] sm:$0xff]
    %v95 = vld [vmem:[#allocation2 + $0x1d0] sm:$0xff]
    %v96 = vld [vmem:[#allocation2 + $0x1d8] sm:$0xff]
    %v97 = vld [vmem:[#allocation2 + $0x1e0] sm:$0xff]
    %v98 = vld [vmem:[#allocation2 + $0x1e8] sm:$0xff]
    %v99 = vld [vmem:[#allocation2 + $0x1f0] sm:$0xff]
    %v100 = vld [vmem:[#allocation2 + $0x1f8] sm:$0xff]
    %v101 = vld [vmem:[#allocation2 + $0x200] sm:$0xff]
    %v102 = vld [vmem:[#allocation2 + $0x208] sm:$0xff]
    %v103 = vld [vmem:[#allocation2 + $0x210] sm:$0xff]
    %v104 = vld [vmem:[#allocation2 + $0x218] sm:$0xff]
    %v105 = vld [vmem:[#allocation2 + $0x220] sm:$0xff]
    %v106 = vld [vmem:[#allocation2 + $0x228] sm:$0xff]
    %v107 = vld [vmem:[#allocation2 + $0x230] sm:$0xff]
    %v108 = vld [vmem:[#allocation2 + $0x238] sm:$0xff]
    %v109 = vld [vmem:[#allocation2 + $0x240] sm:$0xff]
    %v110 = vld [vmem:[#allocation2 + $0x248] sm:$0xff]
    %v111 = vld [vmem:[#allocation2 + $0x250] sm:$0xff]
    %v112 = vld [vmem:[#allocation2 + $0x258] sm:$0xff]
    %v113 = vld [vmem:[#allocation2 + $0x260] sm:$0xff]
    %v114 = vld [vmem:[#allocation2 + $0x268] sm:$0xff]
    %v115 = vld [vmem:[#allocation2 + $0x270] sm:$0xff]
    %v116 = vld [vmem:[#allocation2 + $0x278] sm:$0xff]
    %v117 = vld [vmem:[#allocation2 + $0x280] sm:$0xff]
    %v118 = vld [vmem:[#allocation2 + $0x288] sm:$0xff]
    %v119 = vld [vmem:[#allocation2 + $0x290] sm:$0xff]
    %v120 = vld [vmem:[#allocation2 + $0x298] sm:$0xff]
    %v121 = vld [vmem:[#allocation2 + $0x2a0] sm:$0xff]
    %v122 = vld [vmem:[#allocation2 + $0x2a8] sm:$0xff]
    %v123 = vld [vmem:[#allocation2 + $0x2b0] sm:$0xff]
    %v124 = vld [vmem:[#allocation2 + $0x2b8] sm:$0xff]
    %v125 = vld [vmem:[#allocation2 + $0x2c0] sm:$0xff]
    %v126 = vld [vmem:[#allocation2 + $0x2c8] sm:$0xff]
    %v127 = vld [vmem:[#allocation2 + $0x2d0] sm:$0xff]
    %v128 = vld [vmem:[#allocation2 + $0x2d8] sm:$0xff]
    %v129 = vld [vmem:[#allocation2 + $0x2e0] sm:$0xff]
    %v130 = vld [vmem:[#allocation2 + $0x2e8] sm:$0xff]
    %v131 = vld [vmem:[#allocation2 + $0x2f0] sm:$0xff]
    %v132 = vld [vmem:[#allocation2 + $0x2f8] sm:$0xff]
    %v135 = vunpack.c.l.s4 1966171168
    %v136 = vunpack.c.0.s8 %v135
    %v137 = vlaneseq
    %v138 = vshrl.u32 %v137, 7
    %v139 = vsub.s32 %v136, %v138
    %v140 = vrot.slane %v36, %v139
    %v141 = vcombine.high %v140, %v140
    %v143 = vunpack.c.l.s4 1966171168
    %v144 = vunpack.c.0.s8 %v143
    %v145 = vlaneseq
    %v146 = vshrl.u32 %v145, 7
    %v147 = vsub.s32 %v144, %v146
    %v148 = vrot.slane %v140, %v147
    %v150 = vunpack.c.l.s4 1966171168
    %v151 = vunpack.c.0.s8 %v150
    %v152 = vlaneseq
    %v153 = vshrl.u32 %v152, 7
    %v154 = vsub.s32 %v151, %v153
    %v155 = vrot.slane %v141, %v154
    %v156 = vcombine.high %v148, %v148
    %v256 = vunpack.c.l.b16 %v37
    %v257 = vunpack.c.h.b16 %v37
    %v258 = vunpack.c.l.b16 %v38
    %v259 = vunpack.c.h.b16 %v38
    %v260 = vunpack.c.l.b16 %v39
    %v261 = vunpack.c.h.b16 %v39
    %v262 = vunpack.c.l.b16 %v40
    %v263 = vunpack.c.h.b16 %v40
    %v264 = vunpack.c.l.b16 %v41
    %v265 = vunpack.c.h.b16 %v41
    %v266 = vunpack.c.l.b16 %v42
    %v267 = vunpack.c.h.b16 %v42
    %v268 = vunpack.c.l.b16 %v43
    %v269 = vunpack.c.h.b16 %v43
    %v270 = vunpack.c.l.b16 %v44
    %v271 = vunpack.c.h.b16 %v44
    %v272 = vunpack.c.l.b16 %v45
    %v273 = vunpack.c.h.b16 %v45
    %v274 = vunpack.c.l.b16 %v46
    %v275 = vunpack.c.h.b16 %v46
    %v276 = vunpack.c.l.b16 %v47
    %v277 = vunpack.c.h.b16 %v47
    %v278 = vunpack.c.l.b16 %v48
    %v279 = vunpack.c.h.b16 %v48
    %v280 = vunpack.c.l.b16 %v49
    %v281 = vunpack.c.h.b16 %v49
    %v282 = vunpack.c.l.b16 %v50
    %v283 = vunpack.c.h.b16 %v50
    %v284 = vunpack.c.l.b16 %v51
    %v285 = vunpack.c.h.b16 %v51
    %v286 = vunpack.c.l.b16 %v52
    %v287 = vunpack.c.h.b16 %v52
    %v288 = vunpack.c.l.b16 %v53
    %v289 = vunpack.c.h.b16 %v53
    %v290 = vunpack.c.l.b16 %v54
    %v291 = vunpack.c.h.b16 %v54
    %v292 = vunpack.c.l.b16 %v55
    %v293 = vunpack.c.h.b16 %v55
    %v294 = vunpack.c.l.b16 %v56
    %v295 = vunpack.c.h.b16 %v56
    %v296 = vunpack.c.l.b16 %v57
    %v297 = vunpack.c.h.b16 %v57
    %v298 = vunpack.c.l.b16 %v58
    %v299 = vunpack.c.h.b16 %v58
    %v300 = vunpack.c.l.b16 %v59
    %v301 = vunpack.c.h.b16 %v59
    %v302 = vunpack.c.l.b16 %v60
    %v303 = vunpack.c.h.b16 %v60
    %v304 = vunpack.c.l.b16 %v61
    %v305 = vunpack.c.h.b16 %v61
    %v306 = vunpack.c.l.b16 %v62
    %v307 = vunpack.c.h.b16 %v62
    %v308 = vunpack.c.l.b16 %v63
    %v309 = vunpack.c.h.b16 %v63
    %v310 = vunpack.c.l.b16 %v64
    %v311 = vunpack.c.h.b16 %v64
    %v312 = vunpack.c.l.b16 %v65
    %v313 = vunpack.c.h.b16 %v65
    %v314 = vunpack.c.l.b16 %v66
    %v315 = vunpack.c.h.b16 %v66
    %v316 = vunpack.c.l.b16 %v67
    %v317 = vunpack.c.h.b16 %v67
    %v318 = vunpack.c.l.b16 %v68
    %v319 = vunpack.c.h.b16 %v68
    %v320 = vunpack.c.l.b16 %v69
    %v321 = vunpack.c.h.b16 %v69
    %v322 = vunpack.c.l.b16 %v70
    %v323 = vunpack.c.h.b16 %v70
    %v324 = vunpack.c.l.b16 %v71
    %v325 = vunpack.c.h.b16 %v71
    %v326 = vunpack.c.l.b16 %v72
    %v327 = vunpack.c.h.b16 %v72
    %v328 = vunpack.c.l.b16 %v73
    %v329 = vunpack.c.h.b16 %v73
    %v330 = vunpack.c.l.b16 %v74
    %v331 = vunpack.c.h.b16 %v74
    %v332 = vunpack.c.l.b16 %v75
    %v333 = vunpack.c.h.b16 %v75
    %v334 = vunpack.c.l.b16 %v76
    %v335 = vunpack.c.h.b16 %v76
    %v336 = vunpack.c.l.b16 %v77
    %v337 = vunpack.c.h.b16 %v77
    %v338 = vunpack.c.l.b16 %v78
    %v339 = vunpack.c.h.b16 %v78
    %v340 = vunpack.c.l.b16 %v79
    %v341 = vunpack.c.h.b16 %v79
    %v342 = vunpack.c.l.b16 %v80
    %v343 = vunpack.c.h.b16 %v80
    %v344 = vunpack.c.l.b16 %v81
    %v345 = vunpack.c.h.b16 %v81
    %v346 = vunpack.c.l.b16 %v82
    %v347 = vunpack.c.h.b16 %v82
    %v348 = vunpack.c.l.b16 %v83
    %v349 = vunpack.c.h.b16 %v83
    %v350 = vunpack.c.l.b16 %v84
    %v351 = vunpack.c.h.b16 %v84
    %v352 = vunpack.c.l.b16 %v85
    %v353 = vunpack.c.h.b16 %v85
    %v354 = vunpack.c.l.b16 %v86
    %v355 = vunpack.c.h.b16 %v86
    %v356 = vunpack.c.l.b16 %v87
    %v357 = vunpack.c.h.b16 %v87
    %v358 = vunpack.c.l.b16 %v88
    %v359 = vunpack.c.h.b16 %v88
    %v360 = vunpack.c.l.b16 %v89
    %v361 = vunpack.c.h.b16 %v89
    %v362 = vunpack.c.l.b16 %v90
    %v363 = vunpack.c.h.b16 %v90
    %v364 = vunpack.c.l.b16 %v91
    %v365 = vunpack.c.h.b16 %v91
    %v366 = vunpack.c.l.b16 %v92
    %v367 = vunpack.c.h.b16 %v92
    %v368 = vunpack.c.l.b16 %v93
    %v369 = vunpack.c.h.b16 %v93
    %v370 = vunpack.c.l.b16 %v94
    %v371 = vunpack.c.h.b16 %v94
    %v372 = vunpack.c.l.b16 %v95
    %v373 = vunpack.c.h.b16 %v95
    %v374 = vunpack.c.l.b16 %v96
    %v375 = vunpack.c.h.b16 %v96
    %v376 = vunpack.c.l.b16 %v97
    %v377 = vunpack.c.h.b16 %v97
    %v378 = vunpack.c.l.b16 %v98
    %v379 = vunpack.c.h.b16 %v98
    %v380 = vunpack.c.l.b16 %v99
    %v381 = vunpack.c.h.b16 %v99
    %v382 = vunpack.c.l.b16 %v100
    %v383 = vunpack.c.h.b16 %v100
    %v384 = vunpack.c.l.b16 %v101
    %v385 = vunpack.c.h.b16 %v101
    %v386 = vunpack.c.l.b16 %v102
    %v387 = vunpack.c.h.b16 %v102
    %v388 = vunpack.c.l.b16 %v103
    %v389 = vunpack.c.h.b16 %v103
    %v390 = vunpack.c.l.b16 %v104
    %v391 = vunpack.c.h.b16 %v104
    %v392 = vunpack.c.l.b16 %v105
    %v393 = vunpack.c.h.b16 %v105
    %v394 = vunpack.c.l.b16 %v106
    %v395 = vunpack.c.h.b16 %v106
    %v396 = vunpack.c.l.b16 %v107
    %v397 = vunpack.c.h.b16 %v107
    %v398 = vunpack.c.l.b16 %v108
    %v399 = vunpack.c.h.b16 %v108
    %v400 = vunpack.c.l.b16 %v109
    %v401 = vunpack.c.h.b16 %v109
    %v402 = vunpack.c.l.b16 %v110
    %v403 = vunpack.c.h.b16 %v110
    %v404 = vunpack.c.l.b16 %v111
    %v405 = vunpack.c.h.b16 %v111
    %v406 = vunpack.c.l.b16 %v112
    %v407 = vunpack.c.h.b16 %v112
    %v408 = vunpack.c.l.b16 %v113
    %v409 = vunpack.c.h.b16 %v113
    %v410 = vunpack.c.l.b16 %v114
    %v411 = vunpack.c.h.b16 %v114
    %v412 = vunpack.c.l.b16 %v115
    %v413 = vunpack.c.h.b16 %v115
    %v414 = vunpack.c.l.b16 %v116
    %v415 = vunpack.c.h.b16 %v116
    %v416 = vunpack.c.l.b16 %v117
    %v417 = vunpack.c.h.b16 %v117
    %v418 = vunpack.c.l.b16 %v118
    %v419 = vunpack.c.h.b16 %v118
    %v420 = vunpack.c.l.b16 %v119
    %v421 = vunpack.c.h.b16 %v119
    %v422 = vunpack.c.l.b16 %v120
    %v423 = vunpack.c.h.b16 %v120
    %v424 = vunpack.c.l.b16 %v121
    %v425 = vunpack.c.h.b16 %v121
    %v426 = vunpack.c.l.b16 %v122
    %v427 = vunpack.c.h.b16 %v122
    %v428 = vunpack.c.l.b16 %v123
    %v429 = vunpack.c.h.b16 %v123
    %v430 = vunpack.c.l.b16 %v124
    %v431 = vunpack.c.h.b16 %v124
    %v432 = vunpack.c.l.b16 %v125
    %v433 = vunpack.c.h.b16 %v125
    %v434 = vunpack.c.l.b16 %v126
    %v435 = vunpack.c.h.b16 %v126
    %v436 = vunpack.c.l.b16 %v127
    %v437 = vunpack.c.h.b16 %v127
    %v438 = vunpack.c.l.b16 %v128
    %v439 = vunpack.c.h.b16 %v128
    %v440 = vunpack.c.l.b16 %v129
    %v441 = vunpack.c.h.b16 %v129
    %v442 = vunpack.c.l.b16 %v130
    %v443 = vunpack.c.h.b16 %v130
    %v444 = vunpack.c.l.b16 %v131
    %v445 = vunpack.c.h.b16 %v131
    %v446 = vunpack.c.l.b16 %v132
    %v447 = vunpack.c.h.b16 %v132
    %v448 = vpack.c.b16 %v260, %v256
    %v449 = vpack.c.b16 %v261, %v257
    %v450 = vpack.c.b16 %v262, %v258
    %v451 = vpack.c.b16 %v263, %v259
    %v452 = vpack.c.b16 %v268, %v264
    %v453 = vpack.c.b16 %v269, %v265
    %v454 = vpack.c.b16 %v270, %v266
    %v455 = vpack.c.b16 %v271, %v267
    %v456 = vpack.c.b16 %v276, %v272
    %v457 = vpack.c.b16 %v277, %v273
    %v458 = vpack.c.b16 %v278, %v274
    %v459 = vpack.c.b16 %v279, %v275
    %v460 = vpack.c.b16 %v284, %v280
    %v461 = vpack.c.b16 %v285, %v281
    %v462 = vpack.c.b16 %v286, %v282
    %v463 = vpack.c.b16 %v287, %v283
    %v464 = vpack.c.b16 %v292, %v288
    %v465 = vpack.c.b16 %v293, %v289
    %v466 = vpack.c.b16 %v294, %v290
    %v467 = vpack.c.b16 %v295, %v291
    %v468 = vpack.c.b16 %v300, %v296
    %v469 = vpack.c.b16 %v301, %v297
    %v470 = vpack.c.b16 %v302, %v298
    %v471 = vpack.c.b16 %v303, %v299
    %v472 = vpack.c.b16 %v308, %v304
    %v473 = vpack.c.b16 %v309, %v305
    %v474 = vpack.c.b16 %v310, %v306
    %v475 = vpack.c.b16 %v311, %v307
    %v476 = vpack.c.b16 %v316, %v312
    %v477 = vpack.c.b16 %v317, %v313
    %v478 = vpack.c.b16 %v318, %v314
    %v479 = vpack.c.b16 %v319, %v315
    %v480 = vpack.c.b16 %v324, %v320
    %v481 = vpack.c.b16 %v325, %v321
    %v482 = vpack.c.b16 %v326, %v322
    %v483 = vpack.c.b16 %v327, %v323
    %v484 = vpack.c.b16 %v332, %v328
    %v485 = vpack.c.b16 %v333, %v329
    %v486 = vpack.c.b16 %v334, %v330
    %v487 = vpack.c.b16 %v335, %v331
    %v488 = vpack.c.b16 %v340, %v336
    %v489 = vpack.c.b16 %v341, %v337
    %v490 = vpack.c.b16 %v342, %v338
    %v491 = vpack.c.b16 %v343, %v339
    %v492 = vpack.c.b16 %v348, %v344
    %v493 = vpack.c.b16 %v349, %v345
    %v494 = vpack.c.b16 %v350, %v346
    %v495 = vpack.c.b16 %v351, %v347
    %v496 = vpack.c.b16 %v356, %v352
    %v497 = vpack.c.b16 %v357, %v353
    %v498 = vpack.c.b16 %v358, %v354
    %v499 = vpack.c.b16 %v359, %v355
    %v500 = vpack.c.b16 %v364, %v360
    %v501 = vpack.c.b16 %v365, %v361
    %v502 = vpack.c.b16 %v366, %v362
    %v503 = vpack.c.b16 %v367, %v363
    %v504 = vpack.c.b16 %v372, %v368
    %v505 = vpack.c.b16 %v373, %v369
    %v506 = vpack.c.b16 %v374, %v370
    %v507 = vpack.c.b16 %v375, %v371
    %v508 = vpack.c.b16 %v380, %v376
    %v509 = vpack.c.b16 %v381, %v377
    %v510 = vpack.c.b16 %v382, %v378
    %v511 = vpack.c.b16 %v383, %v379
    %v512 = vpack.c.b16 %v388, %v384
    %v513 = vpack.c.b16 %v389, %v385
    %v514 = vpack.c.b16 %v390, %v386
    %v515 = vpack.c.b16 %v391, %v387
    %v516 = vpack.c.b16 %v396, %v392
    %v517 = vpack.c.b16 %v397, %v393
    %v518 = vpack.c.b16 %v398, %v394
    %v519 = vpack.c.b16 %v399, %v395
    %v520 = vpack.c.b16 %v404, %v400
    %v521 = vpack.c.b16 %v405, %v401
    %v522 = vpack.c.b16 %v406, %v402
    %v523 = vpack.c.b16 %v407, %v403
    %v524 = vpack.c.b16 %v412, %v408
    %v525 = vpack.c.b16 %v413, %v409
    %v526 = vpack.c.b16 %v414, %v410
    %v527 = vpack.c.b16 %v415, %v411
    %v528 = vpack.c.b16 %v420, %v416
    %v529 = vpack.c.b16 %v421, %v417
    %v530 = vpack.c.b16 %v422, %v418
    %v531 = vpack.c.b16 %v423, %v419
    %v532 = vpack.c.b16 %v428, %v424
    %v533 = vpack.c.b16 %v429, %v425
    %v534 = vpack.c.b16 %v430, %v426
    %v535 = vpack.c.b16 %v431, %v427
    %v536 = vpack.c.b16 %v436, %v432
    %v537 = vpack.c.b16 %v437, %v433
    %v538 = vpack.c.b16 %v438, %v434
    %v539 = vpack.c.b16 %v439, %v435
    %v540 = vpack.c.b16 %v444, %v440
    %v541 = vpack.c.b16 %v445, %v441
    %v542 = vpack.c.b16 %v446, %v442
    %v543 = vpack.c.b16 %v447, %v443
    %640 = vmatprep.subr.bf16.mxu0 %v477
    %641 = vmatpush1.bf16.msra.mxu0 %v476
    %642 = vmatprep.subr.bf16.mxu0 %v473
    %643 = vmatpush1.bf16.msra.mxu0 %v472
    %644 = vmatprep.subr.bf16.mxu0 %v469
    %645 = vmatpush1.bf16.msra.mxu0 %v468
    %646 = vmatprep.subr.bf16.mxu0 %v465
    %647 = vmatpush1.bf16.msra.mxu0 %v464
    %648 = vmatprep.subr.bf16.mxu0 %v461
    %649 = vmatpush1.bf16.msra.mxu0 %v460
    %650 = vmatprep.subr.bf16.mxu0 %v457
    %651 = vmatpush1.bf16.msra.mxu0 %v456
    %652 = vmatprep.subr.bf16.mxu0 %v453
    %653 = vmatpush1.bf16.msra.mxu0 %v452
    %654 = vmatprep.subr.bf16.mxu0 %v449
    %655 = vmatpush1.bf16.msra.mxu0 %v448
    %656 = vmatprep.subr.bf16.mxu0 %v509
    %657 = vmatpush2.bf16.msra.mxu0 %v508
    %658 = vmatprep.subr.bf16.mxu0 %v505
    %659 = vmatpush2.bf16.msra.mxu0 %v504
    %660 = vmatprep.subr.bf16.mxu0 %v501
    %661 = vmatpush2.bf16.msra.mxu0 %v500
    %662 = vmatprep.subr.bf16.mxu0 %v497
    %663 = vmatpush2.bf16.msra.mxu0 %v496
    %664 = vmatprep.subr.bf16.mxu0 %v493
    %665 = vmatpush2.bf16.msra.mxu0 %v492
    %666 = vmatprep.subr.bf16.mxu0 %v489
    %667 = vmatpush2.bf16.msra.mxu0 %v488
    %668 = vmatprep.subr.bf16.mxu0 %v485
    %669 = vmatpush2.bf16.msra.mxu0 %v484
    %670 = vmatprep.subr.bf16.mxu0 %v481
    %671 = vmatpush2.bf16.msra.mxu0 %v480
    %672 = vmatprep.mubr.bf16.mxu0 %v155
    %673 = vmatmul.mubr.bf16.gmra.mxu0 %v148
    %v674 = vpop.f32.mrf.mxu0
    %v675 = vadd.f32 0.0, %v674
    %v676 = vpop.f32.mrf.mxu0
    %v677 = vadd.f32 0.0, %v676
    %v678 = vpop.f32.mrf.mxu0
    %v679 = vpop.f32.mrf.mxu0
    %680 = vdwg.mxu0
    %681 = vmatprep.subr.bf16.mxu0 %v541
    %682 = vmatpush1.bf16.msra.mxu0 %v540
    %683 = vmatprep.subr.bf16.mxu0 %v537
    %684 = vmatpush1.bf16.msra.mxu0 %v536
    %685 = vmatprep.subr.bf16.mxu0 %v533
    %686 = vmatpush1.bf16.msra.mxu0 %v532
    %687 = vmatprep.subr.bf16.mxu0 %v529
    %688 = vmatpush1.bf16.msra.mxu0 %v528
    %689 = vmatprep.subr.bf16.mxu0 %v525
    %690 = vmatpush1.bf16.msra.mxu0 %v524
    %691 = vmatprep.subr.bf16.mxu0 %v521
    %692 = vmatpush1.bf16.msra.mxu0 %v520
    %693 = vmatprep.subr.bf16.mxu0 %v517
    %694 = vmatpush1.bf16.msra.mxu0 %v516
    %695 = vmatprep.subr.bf16.mxu0 %v513
    %696 = vmatpush1.bf16.msra.mxu0 %v512
    %697 = vmatprep.subr.bf16.mxu0 0
    %698 = vmatpush2.bf16.msra.mxu0 0
    %699 = vmatprep.subr.bf16.mxu0 0
    %700 = vmatpush2.bf16.msra.mxu0 0
    %701 = vmatprep.subr.bf16.mxu0 0
    %702 = vmatpush2.bf16.msra.mxu0 0
    %703 = vmatprep.subr.bf16.mxu0 0
    %704 = vmatpush2.bf16.msra.mxu0 0
    %705 = vmatprep.subr.bf16.mxu0 0
    %706 = vmatpush2.bf16.msra.mxu0 0
    %707 = vmatprep.subr.bf16.mxu0 0
    %708 = vmatpush2.bf16.msra.mxu0 0
    %709 = vmatprep.subr.bf16.mxu0 0
    %710 = vmatpush2.bf16.msra.mxu0 0
    %711 = vmatprep.subr.bf16.mxu0 0
    %712 = vmatpush2.bf16.msra.mxu0 0
    %713 = vmatprep.mubr.bf16.mxu0 0
    %714 = vmatmul.mubr.bf16.gmra.mxu0 %v156
    %v715 = vpop.f32.mrf.mxu0
    %v716 = vadd.f32 %v675, %v715
    %v717 = vpop.f32.mrf.mxu0
    %v718 = vadd.f32 %v677, %v717
    %v719 = vpop.f32.mrf.mxu0
    %v720 = vpop.f32.mrf.mxu0
    %721 = vdwg.mxu0
    %722 = vmatprep.subr.bf16.mxu0 %v479
    %723 = vmatpush1.bf16.msra.mxu0 %v478
    %724 = vmatprep.subr.bf16.mxu0 %v475
    %725 = vmatpush1.bf16.msra.mxu0 %v474
    %726 = vmatprep.subr.bf16.mxu0 %v471
    %727 = vmatpush1.bf16.msra.mxu0 %v470
    %728 = vmatprep.subr.bf16.mxu0 %v467
    %729 = vmatpush1.bf16.msra.mxu0 %v466
    %730 = vmatprep.subr.bf16.mxu0 %v463
    %731 = vmatpush1.bf16.msra.mxu0 %v462
    %732 = vmatprep.subr.bf16.mxu0 %v459
    %733 = vmatpush1.bf16.msra.mxu0 %v458
    %734 = vmatprep.subr.bf16.mxu0 %v455
    %735 = vmatpush1.bf16.msra.mxu0 %v454
    %736 = vmatprep.subr.bf16.mxu0 %v451
    %737 = vmatpush1.bf16.msra.mxu0 %v450
    %738 = vmatprep.subr.bf16.mxu0 %v511
    %739 = vmatpush2.bf16.msra.mxu0 %v510
    %740 = vmatprep.subr.bf16.mxu0 %v507
    %741 = vmatpush2.bf16.msra.mxu0 %v506
    %742 = vmatprep.subr.bf16.mxu0 %v503
    %743 = vmatpush2.bf16.msra.mxu0 %v502
    %744 = vmatprep.subr.bf16.mxu0 %v499
    %745 = vmatpush2.bf16.msra.mxu0 %v498
    %746 = vmatprep.subr.bf16.mxu0 %v495
    %747 = vmatpush2.bf16.msra.mxu0 %v494
    %748 = vmatprep.subr.bf16.mxu0 %v491
    %749 = vmatpush2.bf16.msra.mxu0 %v490
    %750 = vmatprep.subr.bf16.mxu0 %v487
    %751 = vmatpush2.bf16.msra.mxu0 %v486
    %752 = vmatprep.subr.bf16.mxu0 %v483
    %753 = vmatpush2.bf16.msra.mxu0 %v482
    %754 = vmatprep.mubr.bf16.mxu0 %v155
    %755 = vmatmul.mubr.bf16.gmra.mxu0 %v148
    %v756 = vpop.f32.mrf.mxu0
    %v757 = vadd.f32 0.0, %v756
    %v758 = vpop.f32.mrf.mxu0
    %v759 = vadd.f32 0.0, %v758
    %v760 = vpop.f32.mrf.mxu0
    %v761 = vpop.f32.mrf.mxu0
    %762 = vdwg.mxu0
    %763 = vmatprep.subr.bf16.mxu0 %v543
    %764 = vmatpush1.bf16.msra.mxu0 %v542
    %765 = vmatprep.subr.bf16.mxu0 %v539
    %766 = vmatpush1.bf16.msra.mxu0 %v538
    %767 = vmatprep.subr.bf16.mxu0 %v535
    %768 = vmatpush1.bf16.msra.mxu0 %v534
    %769 = vmatprep.subr.bf16.mxu0 %v531
    %770 = vmatpush1.bf16.msra.mxu0 %v530
    %771 = vmatprep.subr.bf16.mxu0 %v527
    %772 = vmatpush1.bf16.msra.mxu0 %v526
    %773 = vmatprep.subr.bf16.mxu0 %v523
    %774 = vmatpush1.bf16.msra.mxu0 %v522
    %775 = vmatprep.subr.bf16.mxu0 %v519
    %776 = vmatpush1.bf16.msra.mxu0 %v518
    %777 = vmatprep.subr.bf16.mxu0 %v515
    %778 = vmatpush1.bf16.msra.mxu0 %v514
    %779 = vmatprep.subr.bf16.mxu0 0
    %780 = vmatpush2.bf16.msra.mxu0 0
    %781 = vmatprep.subr.bf16.mxu0 0
    %782 = vmatpush2.bf16.msra.mxu0 0
    %783 = vmatprep.subr.bf16.mxu0 0
    %784 = vmatpush2.bf16.msra.mxu0 0
    %785 = vmatprep.subr.bf16.mxu0 0
    %786 = vmatpush2.bf16.msra.mxu0 0
    %787 = vmatprep.subr.bf16.mxu0 0
    %788 = vmatpush2.bf16.msra.mxu0 0
    %789 = vmatprep.subr.bf16.mxu0 0
    %790 = vmatpush2.bf16.msra.mxu0 0
    %791 = vmatprep.subr.bf16.mxu0 0
    %792 = vmatpush2.bf16.msra.mxu0 0
    %793 = vmatprep.subr.bf16.mxu0 0
    %794 = vmatpush2.bf16.msra.mxu0 0
    %795 = vmatprep.mubr.bf16.mxu0 0
    %796 = vmatmul.mubr.bf16.gmra.mxu0 %v156
    %v797 = vpop.f32.mrf.mxu0
    %v798 = vadd.f32 %v757, %v797
    %v799 = vpop.f32.mrf.mxu0
    %v800 = vadd.f32 %v759, %v799
    %v801 = vpop.f32.mrf.mxu0
    %v802 = vpop.f32.mrf.mxu0
    %803 = vdwg.mxu0
    %v808 = vcombine.low %v716, %v718
    %v809 = vcombine.low %v798, %v800
    %v811 = vunpack.c.l.s4 1966171168
    %v812 = vunpack.c.0.s8 %v811
    %v813 = vlaneseq
    %v814 = vshrl.u32 %v813, 7
    %v815 = vsub.s32 %v812, %v814
    %v816 = vrot.slane %v808, %v815
    %v818 = vunpack.c.l.s4 1966171168
    %v819 = vunpack.c.0.s8 %v818
    %v820 = vlaneseq
    %v821 = vshrl.u32 %v820, 7
    %v822 = vsub.s32 %v819, %v821
    %v823 = vrot.slane %v809, %v822
    %v824 = vcombine.low %v816, %v823
    %v826 = vunpack.c.l.s4 1966171168
    %v827 = vunpack.c.0.s8 %v826
    %v828 = vlaneseq
    %v829 = vshrl.u32 %v828, 7
    %v830 = vsub.s32 %v827, %v829
    %v831 = vrot.slane %v824, %v830
    %v833 = vadd.f32 %v35, %v831
    %v834 = vlaneseq
    %vm835 = vcmp.ge.s32.totalorder %v834, 0
    %vm836 = vcmp.lt.s32.totalorder %v834, 512
    %vm837 = vmand %vm835, %vm836
    %838 = vst.msk [vmem:[%s2] sm:$0xf] %vm837, %v833
    // Predicated region
    $region18: #{lagrange_interp_fix_inputs_forward.1} parent=1 // pred_check
      _
    $region19: #{lagrange_interp_fix_inputs_forward.1} parent=1 // pred_check_branch
      %840 = sbr.rel (0) target = $region21
    $region20: #{lagrange_interp_fix_inputs_forward.1} parent=1 // pred_region
      _
    $region21: #{lagrange_interp_fix_inputs_forward.1} parent=1 // pred_fallthru
      _
    // Predicated region
    $region22: #{lagrange_interp_fix_inputs_forward.1} parent=1 // pred_check
      _
    $region23: #{lagrange_interp_fix_inputs_forward.1} parent=1 // pred_check_branch
      %842 = sbr.rel (0) target = $region25
    $region24: #{lagrange_interp_fix_inputs_forward.1} parent=1 // pred_region
      _
    $region25: #{lagrange_interp_fix_inputs_forward.1} parent=1 // pred_fallthru
      _
    %843 = vsyncpa [#allocation3], 1

</llo_original>
